<compile_context>
chip_gen: v7x
topology: tpu7x:2x2x1
jax: 0.10.0
libtpu: 0.0.40
codegen_flags: <defaults>
</compile_context>

<pallas_src>
import jax
import jax.numpy as jnp
import numpy as np
from jax.experimental import pallas as pl
from jax.experimental.pallas import tpu as pltpu

SIGMA_DATA = 0.5                     # sigma_data used by StyleTTS2's KDiffusion config
SIGMA_MEAN, SIGMA_STD = -3.0, 1.0    # LogNormal sigma distribution (Karras defaults)

_LANES = 128                         # lane-dense width of the partial-loss output row
_NUM_SCALE_ROWS = 6                  # sigma, c_in, c_skip, c_out, c_noise, w_fac


def _kdiffusion_kernel(x_ref,        # (C, N) clean slab, N = Bb*T
                       noise_ref,    # (C, N) gaussian noise slab
                       scale_ref,    # (6, N) per-sigma rows, lane-broadcast per batch
                       w_ref,        # (C, C) net weight (1x1 conv over channels)
                       b_ref,        # (C, 1) net bias
                       wt_ref,       # (C, 1) net time-embedding projection
                       loss_ref):    # (1, 128) lane-dense partial loss row
    x = x_ref[...]                                  # (C, N) f32
    noise = noise_ref[...]                          # (C, N) f32

    sig_row = scale_ref[0:1, :]                     # (1, N) sigma
    cin_row = scale_ref[1:2, :]                     # (1, N) c_in
    cskip_row = scale_ref[2:3, :]                   # (1, N) c_skip
    cout_row = scale_ref[3:4, :]                    # (1, N) c_out
    cnoise_row = scale_ref[4:5, :]                  # (1, N) c_noise
    w_row = scale_ref[5:6, :]                       # (1, N) loss_weight / (C*T)

    # --- noising + input preconditioning (one slab-wide VPU pass) ---------------
    x_noisy = x + sig_row * noise                   # x + sigma * noise
    x_in = cin_row * x_noisy                        # c_in * x_noisy

    # --- synthetic net: one MXU matmul + bias + rank-1 time-embedding update ----
    # f32 operands / f32 accumulation for exact parity with the reference einsum.
    x_pred = jnp.dot(w_ref[...], x_in, preferred_element_type=jnp.float32)  # (C, N)
    x_pred = x_pred + b_ref[...] + wt_ref[...] * cnoise_row

    # --- denoise + Karras-weighted MSE, reduced fully in-kernel ------------------
    x_den = cskip_row * x_noisy + cout_row * x_pred
    diff = x_den - x
    block_loss = jnp.sum(diff * diff * w_row, axis=(0, 1), keepdims=True)   # (1, 1)

    # Lane-dense store (full 128-lane row, unmasked vst); wrapper reads lane 0.
    loss_ref[...] = jnp.broadcast_to(block_loss, (1, _LANES))


def _default_batch_block(B, C, T):
    """Generation-aware grid sizing (perf review).

    * v5e / v6e have one TensorCore: any grid split is a serial loop that only adds
      ~0.35us/step overhead and shrinks the MXU N extent -> single step (Bb = B).
    * v7x has two TensorCores: a 2-way split only pays off once each half-step moves
      at least a few hundred KiB of input; otherwise fixed per-call cost dominates.
    """
    try:
        kind = jax.devices()[0].device_kind.lower()
    except Exception:       # pragma: no cover - no devices visible at trace time
        kind = ""
    two_cores = "v7" in kind
    half_step_bytes = 2 * (B // 2) * C * T * 4      # x + noise tiles, f32
    if two_cores and B > 1 and B % 2 == 0 and half_step_bytes >= (512 << 10):
        return B // 2
    return B


def _scale_rows(sigmas, sigma_data, C, T, num_blocks, bb):
    """Vectorized KDiffusion.get_scale_weights + loss_weight, as lane-dense rows."""
    sd2 = sigma_data ** 2
    denom = sigmas ** 2 + sd2                                  # sigma^2 + sigma_data^2
    inv_sqrt = 1.0 / jnp.sqrt(denom)
    c_in = inv_sqrt
    c_skip = sd2 / denom
    c_out = sigmas * sigma_data * inv_sqrt
    c_noise = jnp.log(sigmas) * 0.25
    w_fac = denom / (sigmas * sigma_data) ** 2 / float(C * T)  # loss_weight / (C*T)

    rows = jnp.stack([sigmas, c_in, c_skip, c_out, c_noise, w_fac], axis=0)  # (6, B)
    rows = jnp.broadcast_to(rows[:, :, None], (_NUM_SCALE_ROWS, sigmas.shape[0], T))
    rows = (rows.reshape(_NUM_SCALE_ROWS, num_blocks, bb, T)
                .transpose(1, 0, 2, 3)
                .reshape(num_blocks, _NUM_SCALE_ROWS, bb * T))
    return rows.astype(jnp.float32)


def _to_slab(a, num_blocks, bb, C, T):
    """(B, C, T) -> lane-dense (num_blocks, C, Bb*T): slab[g, c, i*T+t] = a[g*bb+i, c, t]."""
    return (a.reshape(num_blocks, bb, C, T)
             .transpose(0, 2, 1, 3)
             .reshape(num_blocks, C, bb * T))


def kdiffusion_loss(x, noise, sigmas, w, bias, wt, *,
                    sigma_data=SIGMA_DATA, batch_block=None):
    """Returns the scalar KDiffusion training loss (mirrors KDiffusion.forward)."""
    B, C, T = x.shape
    if batch_block is None:
        batch_block = _default_batch_block(B, C, T)
    assert B % batch_block == 0, "batch must be divisible by batch_block"
    num_blocks = B // batch_block
    n_lanes = batch_block * T                      # MXU / VPU lane extent per step

    x_slab = _to_slab(x.astype(jnp.float32), num_blocks, batch_block, C, T)
    noise_slab = _to_slab(noise.astype(jnp.float32), num_blocks, batch_block, C, T)
    scale_slab = _scale_rows(sigmas.astype(jnp.float32), float(sigma_data),
                             C, T, num_blocks, batch_block)

    partial = pl.pallas_call(
        _kdiffusion_kernel,
        out_shape=jax.ShapeDtypeStruct((num_blocks, 1, _LANES), jnp.float32),
        grid=(num_blocks,),
        in_specs=[
            pl.BlockSpec((None, C, n_lanes), lambda g: (g, 0, 0)),                 # x slab
            pl.BlockSpec((None, C, n_lanes), lambda g: (g, 0, 0)),                 # noise slab
            pl.BlockSpec((None, _NUM_SCALE_ROWS, n_lanes), lambda g: (g, 0, 0)),   # scale rows
            pl.BlockSpec((C, C), lambda g: (0, 0)),                                # net W
            pl.BlockSpec((C, 1), lambda g: (0, 0)),                                # net bias
            pl.BlockSpec((C, 1), lambda g: (0, 0)),                                # net time proj
        ],
        out_specs=pl.BlockSpec((None, 1, _LANES), lambda g: (g, 0, 0)),
        compiler_params=pltpu.CompilerParams(
            dimension_semantics=("parallel",),
            # Conservative, safe on every generation (v7x physical VMEM is 64 MiB);
            # raise on v5e/v6e only when production-size tiles need the headroom.
            vmem_limit_bytes=32 * 1024 * 1024),
    )(x_slab, noise_slab, scale_slab, w, bias, wt)

    # Each grid step wrote sum_b(mse_b * loss_weight_b) broadcast across 128 lanes.
    return jnp.sum(partial[:, 0, 0]) / B


def reference_loss(x, noise, sigmas, w, bias, wt, *, sigma_data=SIGMA_DATA):
    """Pure-JAX reference mirroring the PyTorch KDiffusion.forward."""
    sig = sigmas[:, None, None]
    x_noisy = x + sig * noise
    denom = sig ** 2 + sigma_data ** 2
    c_skip = sigma_data ** 2 / denom
    c_out = sig * sigma_data / jnp.sqrt(denom)
    c_in = 1.0 / jnp.sqrt(denom)
    c_noise = jnp.log(sigmas) * 0.25
    x_in = c_in * x_noisy
    x_pred = (jnp.einsum('oc,bct->bot', w, x_in)
              + bias[None] + wt[None] * c_noise[:, None, None])
    x_den = c_skip * x_noisy + c_out * x_pred
    losses = jnp.mean((x_den - x) ** 2, axis=(1, 2))
    weight = (sigmas ** 2 + sigma_data ** 2) / (sigmas * sigma_data) ** 2
    return jnp.mean(losses * weight)


if __name__ == "__main__":
    B, C, T = 4, 32, 128   # default: one grid step, MXU N = B*T = 512 lanes

    key = jax.random.PRNGKey(0)
    k_x, k_n, k_s, k_w, k_b, k_t = jax.random.split(key, 6)

    x = jax.random.normal(k_x, (B, C, T), dtype=jnp.float32)
    noise = jax.random.normal(k_n, (B, C, T), dtype=jnp.float32)     # randn_like(x)
    # sigma_distribution: LogNormal(mean=-3.0, std=1.0)
    sigmas = jnp.exp(SIGMA_MEAN + SIGMA_STD * jax.random.normal(k_s, (B,),
                                                                dtype=jnp.float32))

    # deterministic synthetic net parameters (stand-in for the StyleTTS2 UNet)
    w = jax.random.normal(k_w, (C, C), dtype=jnp.float32) * (1.0 / np.sqrt(C))
    bias = jax.random.normal(k_b, (C, 1), dtype=jnp.float32) * 0.02
    wt = jax.random.normal(k_t, (C, 1), dtype=jnp.float32) * 0.02

    loss = jax.block_until_ready(
        jax.jit(kdiffusion_loss)(x, noise, sigmas, w, bias, wt))
    ref = jax.block_until_ready(
        jax.jit(reference_loss)(x, noise, sigmas, w, bias, wt))

    assert np.isfinite(float(loss)), "loss is not finite"
    np.testing.assert_allclose(np.asarray(loss), np.asarray(ref),
                               rtol=2e-3, atol=2e-4)
    print("KERNEL_OK")
</pallas_src>

<mosaic_0001>
module attributes {stable_mosaic.version = 11 : i64} {
  func.func @_kdiffusion_kernel(%arg0: i32, %arg1: memref<1x32x512xf32, #tpu.memory_space<vmem>>, %arg2: memref<1x32x512xf32, #tpu.memory_space<vmem>>, %arg3: memref<1x6x512xf32, #tpu.memory_space<vmem>>, %arg4: memref<32x32xf32, #tpu.memory_space<vmem>>, %arg5: memref<32x1xf32, #tpu.memory_space<vmem>>, %arg6: memref<32x1xf32, #tpu.memory_space<vmem>>, %arg7: memref<1x1x128xf32, #tpu.memory_space<vmem>>) attributes {dimension_semantics = [#tpu.dimension_semantics<parallel>], iteration_bounds = array<i64: 1>, scalar_prefetch = 0 : i64, scratch_operands = 0 : i64, tpu.core_type = #tpu.core_type<tc>, window_params = [{transform_indices = @transform_0, window_bounds = array<i64: 1, 32, 512>}, {transform_indices = @transform_1, window_bounds = array<i64: 1, 32, 512>}, {transform_indices = @transform_2, window_bounds = array<i64: 1, 6, 512>}, {pipeline_mode = #tpu.pipeline_mode<synchronous>, transform_indices = @transform_3, window_bounds = array<i64: 32, 32>}, {pipeline_mode = #tpu.pipeline_mode<synchronous>, transform_indices = @transform_4, window_bounds = array<i64: 32, 1>}, {pipeline_mode = #tpu.pipeline_mode<synchronous>, transform_indices = @transform_5, window_bounds = array<i64: 32, 1>}, {transform_indices = @transform_6, window_bounds = array<i64: 1, 1, 128>}]} {
    %c0 = arith.constant 0 : index
    %c0_0 = arith.constant 0 : index
    %c0_1 = arith.constant 0 : index
    %0 = vector.load %arg1[%c0, %c0_0, %c0_1] : memref<1x32x512xf32, #tpu.memory_space<vmem>>, vector<1x32x512xf32>
    %1 = vector.shape_cast %0 : vector<1x32x512xf32> to vector<32x512xf32>
    %c0_2 = arith.constant 0 : index
    %c0_3 = arith.constant 0 : index
    %c0_4 = arith.constant 0 : index
    %2 = vector.load %arg2[%c0_2, %c0_3, %c0_4] : memref<1x32x512xf32, #tpu.memory_space<vmem>>, vector<1x32x512xf32>
    %3 = vector.shape_cast %2 : vector<1x32x512xf32> to vector<32x512xf32>
    %c0_5 = arith.constant 0 : index
    %c0_6 = arith.constant 0 : index
    %c0_7 = arith.constant 0 : index
    %4 = vector.load %arg3[%c0_5, %c0_6, %c0_7] : memref<1x6x512xf32, #tpu.memory_space<vmem>>, vector<1x1x512xf32>
    %5 = vector.shape_cast %4 : vector<1x1x512xf32> to vector<1x512xf32>
    %c0_8 = arith.constant 0 : index
    %c1 = arith.constant 1 : index
    %c0_9 = arith.constant 0 : index
    %6 = vector.load %arg3[%c0_8, %c1, %c0_9] : memref<1x6x512xf32, #tpu.memory_space<vmem>>, vector<1x1x512xf32>
    %7 = vector.shape_cast %6 : vector<1x1x512xf32> to vector<1x512xf32>
    %c0_10 = arith.constant 0 : index
    %c2 = arith.constant 2 : index
    %c0_11 = arith.constant 0 : index
    %8 = vector.load %arg3[%c0_10, %c2, %c0_11] : memref<1x6x512xf32, #tpu.memory_space<vmem>>, vector<1x1x512xf32>
    %9 = vector.shape_cast %8 : vector<1x1x512xf32> to vector<1x512xf32>
    %c0_12 = arith.constant 0 : index
    %c3 = arith.constant 3 : index
    %c0_13 = arith.constant 0 : index
    %10 = vector.load %arg3[%c0_12, %c3, %c0_13] : memref<1x6x512xf32, #tpu.memory_space<vmem>>, vector<1x1x512xf32>
    %11 = vector.shape_cast %10 : vector<1x1x512xf32> to vector<1x512xf32>
    %c0_14 = arith.constant 0 : index
    %c4 = arith.constant 4 : index
    %c0_15 = arith.constant 0 : index
    %12 = vector.load %arg3[%c0_14, %c4, %c0_15] : memref<1x6x512xf32, #tpu.memory_space<vmem>>, vector<1x1x512xf32>
    %13 = vector.shape_cast %12 : vector<1x1x512xf32> to vector<1x512xf32>
    %c0_16 = arith.constant 0 : index
    %c5 = arith.constant 5 : index
    %c0_17 = arith.constant 0 : index
    %14 = vector.load %arg3[%c0_16, %c5, %c0_17] : memref<1x6x512xf32, #tpu.memory_space<vmem>>, vector<1x1x512xf32>
    %15 = vector.shape_cast %14 : vector<1x1x512xf32> to vector<1x512xf32>
    %16 = vector.broadcast %5 : vector<1x512xf32> to vector<32x512xf32>
    %17 = arith.mulf %16, %3 : vector<32x512xf32>
    %18 = arith.addf %1, %17 : vector<32x512xf32>
    %19 = vector.broadcast %7 : vector<1x512xf32> to vector<32x512xf32>
    %20 = arith.mulf %19, %18 : vector<32x512xf32>
    %c0_18 = arith.constant 0 : index
    %c0_19 = arith.constant 0 : index
    %21 = vector.load %arg4[%c0_18, %c0_19] : memref<32x32xf32, #tpu.memory_space<vmem>>, vector<32x32xf32>
    %cst = arith.constant dense<0.000000e+00> : vector<32x512xf32>
    %22 = tpu.matmul %21, %20, %cst {dimension_numbers = #tpu.dot_dimension_numbers<[1], [0], [0], [1], [0, 0, 1, 1], [], []>} : vector<32x32xf32>, vector<32x512xf32>, vector<32x512xf32> -> vector<32x512xf32>
    %c0_20 = arith.constant 0 : index
    %c0_21 = arith.constant 0 : index
    %23 = vector.load %arg5[%c0_20, %c0_21] : memref<32x1xf32, #tpu.memory_space<vmem>>, vector<32x1xf32>
    %24 = vector.broadcast %23 : vector<32x1xf32> to vector<32x512xf32>
    %25 = arith.addf %22, %24 : vector<32x512xf32>
    %c0_22 = arith.constant 0 : index
    %c0_23 = arith.constant 0 : index
    %26 = vector.load %arg6[%c0_22, %c0_23] : memref<32x1xf32, #tpu.memory_space<vmem>>, vector<32x1xf32>
    %27 = vector.broadcast %26 : vector<32x1xf32> to vector<32x512xf32>
    %28 = vector.broadcast %13 : vector<1x512xf32> to vector<32x512xf32>
    %29 = arith.mulf %27, %28 : vector<32x512xf32>
    %30 = arith.addf %25, %29 : vector<32x512xf32>
    %31 = vector.broadcast %9 : vector<1x512xf32> to vector<32x512xf32>
    %32 = arith.mulf %31, %18 : vector<32x512xf32>
    %33 = vector.broadcast %11 : vector<1x512xf32> to vector<32x512xf32>
    %34 = arith.mulf %33, %30 : vector<32x512xf32>
    %35 = arith.addf %32, %34 : vector<32x512xf32>
    %36 = arith.subf %35, %1 : vector<32x512xf32>
    %37 = arith.mulf %36, %36 : vector<32x512xf32>
    %38 = vector.broadcast %15 : vector<1x512xf32> to vector<32x512xf32>
    %39 = arith.mulf %37, %38 : vector<32x512xf32>
    %40 = vector.shape_cast %39 : vector<32x512xf32> to vector<1x32x512xf32>
    %cst_24 = arith.constant dense<0.000000e+00> : vector<1xf32>
    %41 = vector.multi_reduction <add>, %40, %cst_24 [1, 2] : vector<1x32x512xf32> to vector<1xf32>
    %42 = vector.shape_cast %41 : vector<1xf32> to vector<1x1x1xf32>
    %43 = vector.extract %42[0, 0, 0] : f32 from vector<1x1x1xf32>
    %44 = vector.broadcast %43 : f32 to vector<1x1xf32>
    %45 = vector.shape_cast %44 : vector<1x1xf32> to vector<1x1xf32>
    %46 = vector.broadcast %45 : vector<1x1xf32> to vector<1x128xf32>
    %c0_25 = arith.constant 0 : index
    %c0_26 = arith.constant 0 : index
    %c0_27 = arith.constant 0 : index
    %47 = vector.load %arg7[%c0_25, %c0_26, %c0_27] : memref<1x1x128xf32, #tpu.memory_space<vmem>>, vector<1x1x128xf32>
    %48 = vector.shape_cast %47 : vector<1x1x128xf32> to vector<1x128xf32>
    %49 = vector.shape_cast %46 : vector<1x128xf32> to vector<1x1x128xf32>
    tpu.vector_store %arg7[%c0_25, %c0_26, %c0_27], %49 {strides = array<i32>} : memref<1x1x128xf32, #tpu.memory_space<vmem>>, vector<1x1x128xf32>,
    return
  }
  func.func @transform_0(%arg0: i32) -> (i32, i32, i32) {
    %c0_i32 = arith.constant 0 : i32
    %c0_i32_0 = arith.constant 0 : i32
    %c0_i32_1 = arith.constant 0 : i32
    return %arg0, %c0_i32, %c0_i32_0 : i32, i32, i32
  }
  func.func @transform_1(%arg0: i32) -> (i32, i32, i32) {
    %c0_i32 = arith.constant 0 : i32
    %c0_i32_0 = arith.constant 0 : i32
    %c0_i32_1 = arith.constant 0 : i32
    return %arg0, %c0_i32, %c0_i32_0 : i32, i32, i32
  }
  func.func @transform_2(%arg0: i32) -> (i32, i32, i32) {
    %c0_i32 = arith.constant 0 : i32
    %c0_i32_0 = arith.constant 0 : i32
    %c0_i32_1 = arith.constant 0 : i32
    return %arg0, %c0_i32, %c0_i32_0 : i32, i32, i32
  }
  func.func @transform_3(%arg0: i32) -> (i32, i32) {
    %c0_i32 = arith.constant 0 : i32
    %c0_i32_0 = arith.constant 0 : i32
    %c0_i32_1 = arith.constant 0 : i32
    return %c0_i32, %c0_i32_0 : i32, i32
  }
  func.func @transform_4(%arg0: i32) -> (i32, i32) {
    %c0_i32 = arith.constant 0 : i32
    %c0_i32_0 = arith.constant 0 : i32
    %c0_i32_1 = arith.constant 0 : i32
    return %c0_i32, %c0_i32_0 : i32, i32
  }
  func.func @transform_5(%arg0: i32) -> (i32, i32) {
    %c0_i32 = arith.constant 0 : i32
    %c0_i32_0 = arith.constant 0 : i32
    %c0_i32_1 = arith.constant 0 : i32
    return %c0_i32, %c0_i32_0 : i32, i32
  }
  func.func @transform_6(%arg0: i32) -> (i32, i32, i32) {
    %c0_i32 = arith.constant 0 : i32
    %c0_i32_0 = arith.constant 0 : i32
    %c0_i32_1 = arith.constant 0 : i32
    return %arg0, %c0_i32, %c0_i32_0 : i32, i32, i32
  }
}

</mosaic_0001>

<llo_original>
// kernel: kdiffusion_loss.1
$region0: #{kdiffusion_loss.1}
  #allocation0 [shape = 'u32[]', space=smem, size = 0x4, offset = 0x4, fixed_abs, tag = 'smem constant byte address 0x4 - core index']
  #allocation1 [shape = 'u32[144,128]{1,0:T(1,128)}', space=vmem, size = 0x12000, scoped, tag = 'internal scratch']
  %s0 = inlined_call_operand.vmem [shape: f32[1,32,512], index: 0, kind: input, shape index: {}]
  %s1 = inlined_call_operand.vmem [shape: f32[1,32,512], index: 1, kind: input, shape index: {}]
  %s2 = inlined_call_operand.vmem [shape: f32[1,6,512], index: 2, kind: input, shape index: {}]
  %s3 = inlined_call_operand.vmem [shape: f32[32,32], index: 3, kind: input, shape index: {}]
  %s4 = inlined_call_operand.vmem [shape: f32[32,1], index: 4, kind: input, shape index: {}]
  %s5 = inlined_call_operand.vmem [shape: f32[32,1], index: 5, kind: input, shape index: {}]
  %s6 = inlined_call_operand.vmem [shape: f32[1,1,128], index: 6, kind: output, shape index: {}]
  %s7 = sld [smem:[#allocation0]]
  $region34: #{kdiffusion_loss.1} parent=0
    _
  %s9 = ssub.s32 1, %s7
  %s10 = scalar_select 0, %s9, %s7
  // Predicated region
  $region2: #{kdiffusion_loss.1} parent=0 // pred_check
    _
  $region3: #{kdiffusion_loss.1} parent=0 // pred_check_branch
    %12 = sbr.rel (0) target = $region5
  $region4: #{kdiffusion_loss.1} parent=0 // pred_region
    _
  $region5: #{kdiffusion_loss.1} parent=0 // pred_fallthru
    _
  // Predicated region
  $region6: #{kdiffusion_loss.1} parent=0 // pred_check
    _
  $region7: #{kdiffusion_loss.1} parent=0 // pred_check_branch
    %14 = sbr.rel (0) target = $region9
  $region8: #{kdiffusion_loss.1} parent=0 // pred_region
    _
  $region9: #{kdiffusion_loss.1} parent=0 // pred_fallthru
    _
  // Predicated region
  $region10: #{kdiffusion_loss.1} parent=0 // pred_check
    _
  $region11: #{kdiffusion_loss.1} parent=0 // pred_check_branch
    %16 = sbr.rel (0) target = $region13
  $region12: #{kdiffusion_loss.1} parent=0 // pred_region
    _
  $region13: #{kdiffusion_loss.1} parent=0 // pred_fallthru
    _
  // Predicated region
  $region14: #{kdiffusion_loss.1} parent=0 // pred_check
    _
  $region15: #{kdiffusion_loss.1} parent=0 // pred_check_branch
    %18 = sbr.rel (0) target = $region17
  $region16: #{kdiffusion_loss.1} parent=0 // pred_region
    _
  $region17: #{kdiffusion_loss.1} parent=0 // pred_fallthru
    _
  // Predicated region
  $region18: #{kdiffusion_loss.1} parent=0 // pred_check
    _
  $region19: #{kdiffusion_loss.1} parent=0 // pred_check_branch
    %20 = sbr.rel (0) target = $region21
  $region20: #{kdiffusion_loss.1} parent=0 // pred_region
    _
  $region21: #{kdiffusion_loss.1} parent=0 // pred_fallthru
    _
  // Predicated region
  $region22: #{kdiffusion_loss.1} parent=0 // pred_check
    _
  $region23: #{kdiffusion_loss.1} parent=0 // pred_check_branch
    %22 = sbr.rel (0) target = $region25
  $region24: #{kdiffusion_loss.1} parent=0 // pred_region
    _
  $region25: #{kdiffusion_loss.1} parent=0 // pred_fallthru
    _
  %v23 = vld [vmem:[%s0] sm:$0xff]
  %v24 = vld [vmem:[%s0 + $0x8] sm:$0xff]
  %v25 = vld [vmem:[%s0 + $0x10] sm:$0xff]
  %v26 = vld [vmem:[%s0 + $0x18] sm:$0xff]
  %v27 = vld [vmem:[%s0 + $0x20] sm:$0xff]
  %v28 = vld [vmem:[%s0 + $0x28] sm:$0xff]
  %v29 = vld [vmem:[%s0 + $0x30] sm:$0xff]
  %v30 = vld [vmem:[%s0 + $0x38] sm:$0xff]
  %v31 = vld [vmem:[%s0 + $0x40] sm:$0xff]
  %v32 = vld [vmem:[%s0 + $0x48] sm:$0xff]
  %v33 = vld [vmem:[%s0 + $0x50] sm:$0xff]
  %v34 = vld [vmem:[%s0 + $0x58] sm:$0xff]
  %v35 = vld [vmem:[%s0 + $0x60] sm:$0xff]
  %v36 = vld [vmem:[%s0 + $0x68] sm:$0xff]
  %v37 = vld [vmem:[%s0 + $0x70] sm:$0xff]
  %v38 = vld [vmem:[%s0 + $0x78] sm:$0xff]
  %v39 = vld [vmem:[%s1] sm:$0xff]
  %v40 = vld [vmem:[%s1 + $0x8] sm:$0xff]
  %v41 = vld [vmem:[%s1 + $0x10] sm:$0xff]
  %v42 = vld [vmem:[%s1 + $0x18] sm:$0xff]
  %v43 = vld [vmem:[%s1 + $0x20] sm:$0xff]
  %v44 = vld [vmem:[%s1 + $0x28] sm:$0xff]
  %v45 = vld [vmem:[%s1 + $0x30] sm:$0xff]
  %v46 = vld [vmem:[%s1 + $0x38] sm:$0xff]
  %v47 = vld [vmem:[%s1 + $0x40] sm:$0xff]
  %v48 = vld [vmem:[%s1 + $0x48] sm:$0xff]
  %v49 = vld [vmem:[%s1 + $0x50] sm:$0xff]
  %v50 = vld [vmem:[%s1 + $0x58] sm:$0xff]
  %v51 = vld [vmem:[%s1 + $0x60] sm:$0xff]
  %v52 = vld [vmem:[%s1 + $0x68] sm:$0xff]
  %v53 = vld [vmem:[%s1 + $0x70] sm:$0xff]
  %v54 = vld [vmem:[%s1 + $0x78] sm:$0xff]
  %v55 = vld [vmem:[%s2] ss:$8 sm:$0xf]
  %s56 = scalar_lea.vmem %s2, 1
  %v57 = vld [vmem:[%s56] ss:$8 sm:$0xf]
  %s58 = scalar_lea.vmem %s2, 2
  %v59 = vld [vmem:[%s58] ss:$8 sm:$0xf]
  %s60 = scalar_lea.vmem %s2, 3
  %v61 = vld [vmem:[%s60] ss:$8 sm:$0xf]
  %s62 = scalar_lea.vmem %s2, 4
  %v63 = vld [vmem:[%s62] ss:$8 sm:$0xf]
  %s64 = scalar_lea.vmem %s2, 5
  %v65 = vld [vmem:[%s64] ss:$8 sm:$0xf]
  %v67 = vlaneseq
  %v68 = vshrl.u32 %v67, 7
  %v69 = vsub.s32 0, %v68
  %v70 = vrot.slane %v55, %v69
  %v71 = vlaneseq
  %v72 = vshrl.u32 %v71, 7
  %v73 = vsub.s32 1, %v72
  %v74 = vrot.slane %v55, %v73
  %v75 = vlaneseq
  %v76 = vshrl.u32 %v75, 7
  %v77 = vsub.s32 2, %v76
  %v78 = vrot.slane %v55, %v77
  %v79 = vlaneseq
  %v80 = vshrl.u32 %v79, 7
  %v81 = vsub.s32 3, %v80
  %v82 = vrot.slane %v55, %v81
  %v87 = vmul.f32 %v70, %v39
  %v88 = vmul.f32 %v74, %v40
  %v89 = vmul.f32 %v78, %v41
  %v90 = vmul.f32 %v82, %v42
  %v91 = vmul.f32 %v70, %v43
  %v92 = vmul.f32 %v74, %v44
  %v93 = vmul.f32 %v78, %v45
  %v94 = vmul.f32 %v82, %v46
  %v95 = vmul.f32 %v70, %v47
  %v96 = vmul.f32 %v74, %v48
  %v97 = vmul.f32 %v78, %v49
  %v98 = vmul.f32 %v82, %v50
  %v99 = vmul.f32 %v70, %v51
  %v100 = vmul.f32 %v74, %v52
  %v101 = vmul.f32 %v78, %v53
  %v102 = vmul.f32 %v82, %v54
  %v103 = vadd.f32 %v23, %v87
  %v104 = vadd.f32 %v24, %v88
  %v105 = vadd.f32 %v25, %v89
  %v106 = vadd.f32 %v26, %v90
  %v107 = vadd.f32 %v27, %v91
  %v108 = vadd.f32 %v28, %v92
  %v109 = vadd.f32 %v29, %v93
  %v110 = vadd.f32 %v30, %v94
  %v111 = vadd.f32 %v31, %v95
  %v112 = vadd.f32 %v32, %v96
  %v113 = vadd.f32 %v33, %v97
  %v114 = vadd.f32 %v34, %v98
  %v115 = vadd.f32 %v35, %v99
  %v116 = vadd.f32 %v36, %v100
  %v117 = vadd.f32 %v37, %v101
  %v118 = vadd.f32 %v38, %v102
  %v120 = vlaneseq
  %v121 = vshrl.u32 %v120, 7
  %v122 = vsub.s32 0, %v121
  %v123 = vrot.slane %v57, %v122
  %v124 = vlaneseq
  %v125 = vshrl.u32 %v124, 7
  %v126 = vsub.s32 1, %v125
  %v127 = vrot.slane %v57, %v126
  %v128 = vlaneseq
  %v129 = vshrl.u32 %v128, 7
  %v130 = vsub.s32 2, %v129
  %v131 = vrot.slane %v57, %v130
  %v132 = vlaneseq
  %v133 = vshrl.u32 %v132, 7
  %v134 = vsub.s32 3, %v133
  %v135 = vrot.slane %v57, %v134
  %v140 = vmul.f32 %v123, %v103
  %v141 = vmul.f32 %v127, %v104
  %v142 = vmul.f32 %v131, %v105
  %v143 = vmul.f32 %v135, %v106
  %v144 = vmul.f32 %v123, %v107
  %v145 = vmul.f32 %v127, %v108
  %v146 = vmul.f32 %v131, %v109
  %v147 = vmul.f32 %v135, %v110
  %v148 = vmul.f32 %v123, %v111
  %v149 = vmul.f32 %v127, %v112
  %v150 = vmul.f32 %v131, %v113
  %v151 = vmul.f32 %v135, %v114
  %v152 = vmul.f32 %v123, %v115
  %v153 = vmul.f32 %v127, %v116
  %v154 = vmul.f32 %v131, %v117
  %v155 = vmul.f32 %v135, %v118
  %v156 = vld [vmem:[%s3] sm:$0xff]
  %v157 = vld [vmem:[%s3 + $0x8] sm:$0xff]
  %v158 = vld [vmem:[%s3 + $0x10] sm:$0xff]
  %v159 = vld [vmem:[%s3 + $0x18] sm:$0xff]
  %v160 = vld [vmem:[%s4] sm:$0xff]
  %v161 = vld [vmem:[%s4 + $0x8] sm:$0xff]
  %v162 = vld [vmem:[%s4 + $0x10] sm:$0xff]
  %v163 = vld [vmem:[%s4 + $0x18] sm:$0xff]
  %165 = vset.pattern.permute.xlu0 0
  %166 = vperm.xlu0 %165, %v160
  %v167 = vpop.permute.xlu0 %166
  %170 = vset.pattern.permute.xlu0 0
  %171 = vperm.xlu0 %170, %v161
  %v172 = vpop.permute.xlu0 %171
  %175 = vset.pattern.permute.xlu0 0
  %176 = vperm.xlu0 %175, %v162
  %v177 = vpop.permute.xlu0 %176
  %180 = vset.pattern.permute.xlu0 0
  %181 = vperm.xlu0 %180, %v163
  %v182 = vpop.permute.xlu0 %181
  %vm184 = vcmask 261120
  %v186 = vsel %vm184, %v156, 0
  %v189 = vsel %vm184, %v157, 0
  %v192 = vsel %vm184, %v158, 0
  %v195 = vsel %vm184, %v159, 0
  %197 = vmatprep.subr.mxu0 %v141
  %198 = vmatpush1.msra.mxu0 %v140
  %199 = vmatprep.subr.mxu0 %v145
  %200 = vmatpush1.msra.mxu0 %v144
  %201 = vmatprep.subr.mxu0 %v149
  %202 = vmatpush1.msra.mxu0 %v148
  %203 = vmatprep.subr.mxu0 %v153
  %204 = vmatpush1.msra.mxu0 %v152
  %205 = vmatprep.subr.mxu0 0.0
  %206 = vmatpush1.msra.mxu0 0.0
  %207 = vmatprep.subr.mxu0 0.0
  %208 = vmatpush1.msra.mxu0 0.0
  %209 = vmatprep.subr.mxu0 0.0
  %210 = vmatpush1.msra.mxu0 0.0
  %211 = vmatprep.subr.mxu0 0.0
  %212 = vmatpush1.msra.mxu0 0.0
  %213 = vmatprep.subr.mxu0 0.0
  %214 = vmatpush1.msra.mxu0 0.0
  %215 = vmatprep.subr.mxu0 0.0
  %216 = vmatpush1.msra.mxu0 0.0
  %217 = vmatprep.subr.mxu0 0.0
  %218 = vmatpush1.msra.mxu0 0.0
  %219 = vmatprep.subr.mxu0 0.0
  %220 = vmatpush1.msra.mxu0 0.0
  %221 = vmatprep.subr.mxu0 0.0
  %222 = vmatpush1.msra.mxu0 0.0
  %223 = vmatprep.subr.mxu0 0.0
  %224 = vmatpush1.msra.mxu0 0.0
  %225 = vmatprep.subr.mxu0 0.0
  %226 = vmatpush1.msra.mxu0 0.0
  %227 = vmatprep.subr.mxu0 0.0
  %228 = vmatpush1.msra.mxu0 0.0
  %229 = vmatprep.subr.mxu0 0.0
  %230 = vmatpush1.msra.mxu0 0.0
  %231 = vmatprep.subr.mxu0 0.0
  %232 = vmatpush1.msra.mxu0 0.0
  %233 = vmatprep.subr.mxu0 0.0
  %234 = vmatpush1.msra.mxu0 0.0
  %235 = vmatprep.subr.mxu0 0.0
  %236 = vmatpush1.msra.mxu0 0.0
  %237 = vmatprep.subr.mxu0 0.0
  %238 = vmatpush1.msra.mxu0 0.0
  %239 = vmatprep.subr.mxu0 0.0
  %240 = vmatpush1.msra.mxu0 0.0
  %241 = vmatprep.subr.mxu0 0.0
  %242 = vmatpush1.msra.mxu0 0.0
  %243 = vmatprep.subr.mxu0 0.0
  %244 = vmatpush1.msra.mxu0 0.0
  %245 = vmatprep.subr.mxu0 0.0
  %246 = vmatpush1.msra.mxu0 0.0
  %247 = vmatprep.subr.mxu0 0.0
  %248 = vmatpush1.msra.mxu0 0.0
  %249 = vmatprep.subr.mxu0 0.0
  %250 = vmatpush1.msra.mxu0 0.0
  %251 = vmatprep.subr.mxu0 0.0
  %252 = vmatpush1.msra.mxu0 0.0
  %253 = vmatprep.subr.mxu0 0.0
  %254 = vmatpush1.msra.mxu0 0.0
  %255 = vmatprep.subr.mxu0 0.0
  %256 = vmatpush1.msra.mxu0 0.0
  %257 = vmatprep.subr.mxu0 0.0
  %258 = vmatpush1.msra.mxu0 0.0
  %259 = vmatprep.subr.mxu0 0.0
  %260 = vmatpush1.msra.mxu0 0.0
  %261 = vmatprep.mubr.f32.mxu0 0.0
  %262 = vmatmul.mubr.f32.gmra.mrb[0].mxu0 %v186
  %v263 = vpop.f32.mrb[0].mxu0
  %v264 = vadd.f32 %v167, %v263
  %v265 = vpop.f32.mrb[0].mxu0
  %v266 = vadd.f32 %v167, %v265
  %267 = vmatprep.mubr.f32.mxu0 0.0
  %268 = vmatmul.mubr.f32.gmra.mrb[0].mxu0 %v189
  %v269 = vpop.f32.mrb[0].mxu0
  %v270 = vadd.f32 %v172, %v269
  %v271 = vpop.f32.mrb[0].mxu0
  %v272 = vadd.f32 %v172, %v271
  %273 = vmatprep.mubr.f32.mxu0 0.0
  %274 = vmatmul.mubr.f32.gmra.mrb[0].mxu0 %v192
  %v275 = vpop.f32.mrb[0].mxu0
  %v276 = vadd.f32 %v177, %v275
  %v277 = vpop.f32.mrb[0].mxu0
  %v278 = vadd.f32 %v177, %v277
  %279 = vmatprep.mubr.f32.mxu0 0.0
  %280 = vmatmul.mubr.f32.gmra.mrb[0].mxu0 %v195
  %v281 = vpop.f32.mrb[0].mxu0
  %v282 = vadd.f32 %v182, %v281
  %v283 = vpop.f32.mrb[0].mxu0
  %v284 = vadd.f32 %v182, %v283
  %285 = vdwg.mxu0
  %286 = vmatprep.subr.mxu0 %v143
  %287 = vmatpush1.msra.mxu0 %v142
  %288 = vmatprep.subr.mxu0 %v147
  %289 = vmatpush1.msra.mxu0 %v146
  %290 = vmatprep.subr.mxu0 %v151
  %291 = vmatpush1.msra.mxu0 %v150
  %292 = vmatprep.subr.mxu0 %v155
  %293 = vmatpush1.msra.mxu0 %v154
  %294 = vmatprep.subr.mxu0 0.0
  %295 = vmatpush1.msra.mxu0 0.0
  %296 = vmatprep.subr.mxu0 0.0
  %297 = vmatpush1.msra.mxu0 0.0
  %298 = vmatprep.subr.mxu0 0.0
  %299 = vmatpush1.msra.mxu0 0.0
  %300 = vmatprep.subr.mxu0 0.0
  %301 = vmatpush1.msra.mxu0 0.0
  %302 = vmatprep.subr.mxu0 0.0
  %303 = vmatpush1.msra.mxu0 0.0
  %304 = vmatprep.subr.mxu0 0.0
  %305 = vmatpush1.msra.mxu0 0.0
  %306 = vmatprep.subr.mxu0 0.0
  %307 = vmatpush1.msra.mxu0 0.0
  %308 = vmatprep.subr.mxu0 0.0
  %309 = vmatpush1.msra.mxu0 0.0
  %310 = vmatprep.subr.mxu0 0.0
  %311 = vmatpush1.msra.mxu0 0.0
  %312 = vmatprep.subr.mxu0 0.0
  %313 = vmatpush1.msra.mxu0 0.0
  %314 = vmatprep.subr.mxu0 0.0
  %315 = vmatpush1.msra.mxu0 0.0
  %316 = vmatprep.subr.mxu0 0.0
  %317 = vmatpush1.msra.mxu0 0.0
  %318 = vmatprep.subr.mxu0 0.0
  %319 = vmatpush1.msra.mxu0 0.0
  %320 = vmatprep.subr.mxu0 0.0
  %321 = vmatpush1.msra.mxu0 0.0
  %322 = vmatprep.subr.mxu0 0.0
  %323 = vmatpush1.msra.mxu0 0.0
  %324 = vmatprep.subr.mxu0 0.0
  %325 = vmatpush1.msra.mxu0 0.0
  %326 = vmatprep.subr.mxu0 0.0
  %327 = vmatpush1.msra.mxu0 0.0
  %328 = vmatprep.subr.mxu0 0.0
  %329 = vmatpush1.msra.mxu0 0.0
  %330 = vmatprep.subr.mxu0 0.0
  %331 = vmatpush1.msra.mxu0 0.0
  %332 = vmatprep.subr.mxu0 0.0
  %333 = vmatpush1.msra.mxu0 0.0
  %334 = vmatprep.subr.mxu0 0.0
  %335 = vmatpush1.msra.mxu0 0.0
  %336 = vmatprep.subr.mxu0 0.0
  %337 = vmatpush1.msra.mxu0 0.0
  %338 = vmatprep.subr.mxu0 0.0
  %339 = vmatpush1.msra.mxu0 0.0
  %340 = vmatprep.subr.mxu0 0.0
  %341 = vmatpush1.msra.mxu0 0.0
  %342 = vmatprep.subr.mxu0 0.0
  %343 = vmatpush1.msra.mxu0 0.0
  %344 = vmatprep.subr.mxu0 0.0
  %345 = vmatpush1.msra.mxu0 0.0
  %346 = vmatprep.subr.mxu0 0.0
  %347 = vmatpush1.msra.mxu0 0.0
  %348 = vmatprep.subr.mxu0 0.0
  %349 = vmatpush1.msra.mxu0 0.0
  %350 = vmatprep.mubr.f32.mxu0 0.0
  %351 = vmatmul.mubr.f32.gmra.mrb[0].mxu0 %v186
  %v352 = vpop.f32.mrb[0].mxu0
  %v353 = vadd.f32 %v167, %v352
  %v354 = vpop.f32.mrb[0].mxu0
  %v355 = vadd.f32 %v167, %v354
  %356 = vmatprep.mubr.f32.mxu0 0.0
  %357 = vmatmul.mubr.f32.gmra.mrb[0].mxu0 %v189
  %v358 = vpop.f32.mrb[0].mxu0
  %v359 = vadd.f32 %v172, %v358
  %v360 = vpop.f32.mrb[0].mxu0
  %v361 = vadd.f32 %v172, %v360
  %362 = vmatprep.mubr.f32.mxu0 0.0
  %363 = vmatmul.mubr.f32.gmra.mrb[0].mxu0 %v192
  %v364 = vpop.f32.mrb[0].mxu0
  %v365 = vadd.f32 %v177, %v364
  %v366 = vpop.f32.mrb[0].mxu0
  %v367 = vadd.f32 %v177, %v366
  %368 = vmatprep.mubr.f32.mxu0 0.0
  %369 = vmatmul.mubr.f32.gmra.mrb[0].mxu0 %v195
  %v370 = vpop.f32.mrb[0].mxu0
  %v371 = vadd.f32 %v182, %v370
  %v372 = vpop.f32.mrb[0].mxu0
  %v373 = vadd.f32 %v182, %v372
  %374 = vdwg.mxu0
  %v375 = vld [vmem:[%s5] sm:$0xff]
  %v376 = vld [vmem:[%s5 + $0x8] sm:$0xff]
  %v377 = vld [vmem:[%s5 + $0x10] sm:$0xff]
  %v378 = vld [vmem:[%s5 + $0x18] sm:$0xff]
  %380 = vset.pattern.permute.xlu0 0
  %381 = vperm.xlu0 %380, %v375
  %v382 = vpop.permute.xlu0 %381
  %385 = vset.pattern.permute.xlu0 0
  %386 = vperm.xlu0 %385, %v376
  %v387 = vpop.permute.xlu0 %386
  %390 = vset.pattern.permute.xlu0 0
  %391 = vperm.xlu0 %390, %v377
  %v392 = vpop.permute.xlu0 %391
  %395 = vset.pattern.permute.xlu0 0
  %396 = vperm.xlu0 %395, %v378
  %v397 = vpop.permute.xlu0 %396
  %v400 = vlaneseq
  %v401 = vshrl.u32 %v400, 7
  %v402 = vsub.s32 0, %v401
  %v403 = vrot.slane %v63, %v402
  %v404 = vlaneseq
  %v405 = vshrl.u32 %v404, 7
  %v406 = vsub.s32 1, %v405
  %v407 = vrot.slane %v63, %v406
  %v408 = vlaneseq
  %v409 = vshrl.u32 %v408, 7
  %v410 = vsub.s32 2, %v409
  %v411 = vrot.slane %v63, %v410
  %v412 = vlaneseq
  %v413 = vshrl.u32 %v412, 7
  %v414 = vsub.s32 3, %v413
  %v415 = vrot.slane %v63, %v414
  %v420 = vmul.f32 %v382, %v403
  %v421 = vmul.f32 %v382, %v407
  %v422 = vmul.f32 %v382, %v411
  %v423 = vmul.f32 %v382, %v415
  %v424 = vmul.f32 %v387, %v403
  %v425 = vmul.f32 %v387, %v407
  %v426 = vmul.f32 %v387, %v411
  %v427 = vmul.f32 %v387, %v415
  %v428 = vmul.f32 %v392, %v403
  %v429 = vmul.f32 %v392, %v407
  %v430 = vmul.f32 %v392, %v411
  %v431 = vmul.f32 %v392, %v415
  %v432 = vmul.f32 %v397, %v403
  %v433 = vmul.f32 %v397, %v407
  %v434 = vmul.f32 %v397, %v411
  %v435 = vmul.f32 %v397, %v415
  %v436 = vadd.f32 %v264, %v420
  %v437 = vadd.f32 %v266, %v421
  %v438 = vadd.f32 %v353, %v422
  %v439 = vadd.f32 %v355, %v423
  %v440 = vadd.f32 %v270, %v424
  %v441 = vadd.f32 %v272, %v425
  %v442 = vadd.f32 %v359, %v426
  %v443 = vadd.f32 %v361, %v427
  %v444 = vadd.f32 %v276, %v428
  %v445 = vadd.f32 %v278, %v429
  %v446 = vadd.f32 %v365, %v430
  %v447 = vadd.f32 %v367, %v431
  %v448 = vadd.f32 %v282, %v432
  %v449 = vadd.f32 %v284, %v433
  %v450 = vadd.f32 %v371, %v434
  %v451 = vadd.f32 %v373, %v435
  %v453 = vlaneseq
  %v454 = vshrl.u32 %v453, 7
  %v455 = vsub.s32 0, %v454
  %v456 = vrot.slane %v59, %v455
  %v457 = vlaneseq
  %v458 = vshrl.u32 %v457, 7
  %v459 = vsub.s32 1, %v458
  %v460 = vrot.slane %v59, %v459
  %v461 = vlaneseq
  %v462 = vshrl.u32 %v461, 7
  %v463 = vsub.s32 2, %v462
  %v464 = vrot.slane %v59, %v463
  %v465 = vlaneseq
  %v466 = vshrl.u32 %v465, 7
  %v467 = vsub.s32 3, %v466
  %v468 = vrot.slane %v59, %v467
  %v473 = vmul.f32 %v456, %v103
  %v474 = vmul.f32 %v460, %v104
  %v475 = vmul.f32 %v464, %v105
  %v476 = vmul.f32 %v468, %v106
  %v477 = vmul.f32 %v456, %v107
  %v478 = vmul.f32 %v460, %v108
  %v479 = vmul.f32 %v464, %v109
  %v480 = vmul.f32 %v468, %v110
  %v481 = vmul.f32 %v456, %v111
  %v482 = vmul.f32 %v460, %v112
  %v483 = vmul.f32 %v464, %v113
  %v484 = vmul.f32 %v468, %v114
  %v485 = vmul.f32 %v456, %v115
  %v486 = vmul.f32 %v460, %v116
  %v487 = vmul.f32 %v464, %v117
  %v488 = vmul.f32 %v468, %v118
  %v490 = vlaneseq
  %v491 = vshrl.u32 %v490, 7
  %v492 = vsub.s32 0, %v491
  %v493 = vrot.slane %v61, %v492
  %v494 = vlaneseq
  %v495 = vshrl.u32 %v494, 7
  %v496 = vsub.s32 1, %v495
  %v497 = vrot.slane %v61, %v496
  %v498 = vlaneseq
  %v499 = vshrl.u32 %v498, 7
  %v500 = vsub.s32 2, %v499
  %v501 = vrot.slane %v61, %v500
  %v502 = vlaneseq
  %v503 = vshrl.u32 %v502, 7
  %v504 = vsub.s32 3, %v503
  %v505 = vrot.slane %v61, %v504
  %v510 = vmul.f32 %v493, %v436
  %v511 = vmul.f32 %v497, %v437
  %v512 = vmul.f32 %v501, %v438
  %v513 = vmul.f32 %v505, %v439
  %v514 = vmul.f32 %v493, %v440
  %v515 = vmul.f32 %v497, %v441
  %v516 = vmul.f32 %v501, %v442
  %v517 = vmul.f32 %v505, %v443
  %v518 = vmul.f32 %v493, %v444
  %v519 = vmul.f32 %v497, %v445
  %v520 = vmul.f32 %v501, %v446
  %v521 = vmul.f32 %v505, %v447
  %v522 = vmul.f32 %v493, %v448
  %v523 = vmul.f32 %v497, %v449
  %v524 = vmul.f32 %v501, %v450
  %v525 = vmul.f32 %v505, %v451
  %v526 = vadd.f32 %v473, %v510
  %v527 = vadd.f32 %v474, %v511
  %v528 = vadd.f32 %v475, %v512
  %v529 = vadd.f32 %v476, %v513
  %v530 = vadd.f32 %v477, %v514
  %v531 = vadd.f32 %v478, %v515
  %v532 = vadd.f32 %v479, %v516
  %v533 = vadd.f32 %v480, %v517
  %v534 = vadd.f32 %v481, %v518
  %v535 = vadd.f32 %v482, %v519
  %v536 = vadd.f32 %v483, %v520
  %v537 = vadd.f32 %v484, %v521
  %v538 = vadd.f32 %v485, %v522
  %v539 = vadd.f32 %v486, %v523
  %v540 = vadd.f32 %v487, %v524
  %v541 = vadd.f32 %v488, %v525
  %v542 = vsub.f32 %v526, %v23
  %v543 = vsub.f32 %v527, %v24
  %v544 = vsub.f32 %v528, %v25
  %v545 = vsub.f32 %v529, %v26
  %v546 = vsub.f32 %v530, %v27
  %v547 = vsub.f32 %v531, %v28
  %v548 = vsub.f32 %v532, %v29
  %v549 = vsub.f32 %v533, %v30
  %v550 = vsub.f32 %v534, %v31
  %v551 = vsub.f32 %v535, %v32
  %v552 = vsub.f32 %v536, %v33
  %v553 = vsub.f32 %v537, %v34
  %v554 = vsub.f32 %v538, %v35
  %v555 = vsub.f32 %v539, %v36
  %v556 = vsub.f32 %v540, %v37
  %v557 = vsub.f32 %v541, %v38
  %v558 = vmul.f32 %v542, %v542
  %v559 = vmul.f32 %v543, %v543
  %v560 = vmul.f32 %v544, %v544
  %v561 = vmul.f32 %v545, %v545
  %v562 = vmul.f32 %v546, %v546
  %v563 = vmul.f32 %v547, %v547
  %v564 = vmul.f32 %v548, %v548
  %v565 = vmul.f32 %v549, %v549
  %v566 = vmul.f32 %v550, %v550
  %v567 = vmul.f32 %v551, %v551
  %v568 = vmul.f32 %v552, %v552
  %v569 = vmul.f32 %v553, %v553
  %v570 = vmul.f32 %v554, %v554
  %v571 = vmul.f32 %v555, %v555
  %v572 = vmul.f32 %v556, %v556
  %v573 = vmul.f32 %v557, %v557
  %v575 = vlaneseq
  %v576 = vshrl.u32 %v575, 7
  %v577 = vsub.s32 0, %v576
  %v578 = vrot.slane %v65, %v577
  %v579 = vlaneseq
  %v580 = vshrl.u32 %v579, 7
  %v581 = vsub.s32 1, %v580
  %v582 = vrot.slane %v65, %v581
  %v583 = vlaneseq
  %v584 = vshrl.u32 %v583, 7
  %v585 = vsub.s32 2, %v584
  %v586 = vrot.slane %v65, %v585
  %v587 = vlaneseq
  %v588 = vshrl.u32 %v587, 7
  %v589 = vsub.s32 3, %v588
  %v590 = vrot.slane %v65, %v589
  %v595 = vmul.f32 %v558, %v578
  %v596 = vmul.f32 %v559, %v582
  %v597 = vmul.f32 %v560, %v586
  %v598 = vmul.f32 %v561, %v590
  %v599 = vmul.f32 %v562, %v578
  %v600 = vmul.f32 %v563, %v582
  %v601 = vmul.f32 %v564, %v586
  %v602 = vmul.f32 %v565, %v590
  %v603 = vmul.f32 %v566, %v578
  %v604 = vmul.f32 %v567, %v582
  %v605 = vmul.f32 %v568, %v586
  %v606 = vmul.f32 %v569, %v590
  %v607 = vmul.f32 %v570, %v578
  %v608 = vmul.f32 %v571, %v582
  %v609 = vmul.f32 %v572, %v586
  %v610 = vmul.f32 %v573, %v590
  %v611 = vadd.f32 %v595, %v596
  %v612 = vadd.f32 %v611, %v597
  %v613 = vadd.f32 %v612, %v598
  %v614 = vadd.f32 %v613, %v599
  %v615 = vadd.f32 %v614, %v600
  %v616 = vadd.f32 %v615, %v601
  %v617 = vadd.f32 %v616, %v602
  %v618 = vadd.f32 %v617, %v603
  %v619 = vadd.f32 %v618, %v604
  %v620 = vadd.f32 %v619, %v605
  %v621 = vadd.f32 %v620, %v606
  %v622 = vadd.f32 %v621, %v607
  %v623 = vadd.f32 %v622, %v608
  %v624 = vadd.f32 %v623, %v609
  %v625 = vadd.f32 %v624, %v610
  %626 = vadd.xlane.f32.xlu0 %v625
  %v627 = vpop.xlane.xlu0 %626
  %v628 = vrot.slane %v627, 4
  %v629 = vadd.f32 %v627, %v628
  %v630 = vrot.slane %v629, 2
  %v631 = vadd.f32 %v629, %v630
  %v632 = vrot.slane %v631, 1
  %v633 = vadd.f32 %v631, %v632
  %s634 = vtos %v633
  %v635 = vstv %s634
  %636 = vst [vmem:[%s6] sm:$0x1] %v635
  // Predicated region
  $region26: #{kdiffusion_loss.1} parent=0 // pred_check
    _
  $region27: #{kdiffusion_loss.1} parent=0 // pred_check_branch
    %638 = sbr.rel (0) target = $region29
  $region28: #{kdiffusion_loss.1} parent=0 // pred_region
    _
  $region29: #{kdiffusion_loss.1} parent=0 // pred_fallthru
    _
  // Predicated region
  $region30: #{kdiffusion_loss.1} parent=0 // pred_check
    _
  $region31: #{kdiffusion_loss.1} parent=0 // pred_check_branch
    %640 = sbr.rel (0) target = $region33
  $region32: #{kdiffusion_loss.1} parent=0 // pred_region
    _
  $region33: #{kdiffusion_loss.1} parent=0 // pred_fallthru
    _

</llo_original>
